<compile_context>
chip_gen: v7x
topology: tpu7x:2x2x1
jax: 0.10.0
libtpu: 0.0.40
codegen_flags: <defaults>
</compile_context>

<pallas_src>
import functools

import jax
import jax.numpy as jnp
from jax.experimental import pallas as pl
from jax.experimental.pallas import tpu as pltpu

LANES = 128
SUBLANES = 8
TILE = SUBLANES * LANES            # 1024 elements = one (8,128) f32 tile
MAX_BLOCK_ROWS = 4096              # 4096*128*4B = 2 MiB per input per buffer
NUM_CORE_SPLITS = 2                # leading "parallel" grid axis (v7x megacore)


def _pu_kernel(x_ref, y_ref, out_ref, *, total_rows, block_rows,
               steps_per_core, needs_row_mask, use_adaptive, gamma, eps,
               base_w):
    c = pl.program_id(0)   # core-split index   ("parallel")
    i = pl.program_id(1)   # streaming step     ("arbitrary")

    @pl.when(i == 0)
    def _init():
        out_ref[...] = jnp.zeros_like(out_ref)

    blk = c * steps_per_core + i          # global block index (unclamped)
    row0 = blk * block_rows               # first global row of this block

    # Phantom (clamped) blocks of the core split contribute nothing: skip all
    # loads and compute for them.
    @pl.when(row0 < total_rows)
    def _accumulate():
        x = x_ref[...]                    # (block_rows, LANES) f32
        y = y_ref[...]

        is_p = y == 1.0
        is_u = y == 0.0
        if needs_row_mask:
            # Only needed when block_rows does not divide the (tile-padded)
            # row count: the ragged last block's tail is stale VMEM.
            row_ids = jax.lax.broadcasted_iota(jnp.int32,
                                               (block_rows, LANES), 0)
            valid = (row0 + row_ids) < total_rows
            is_p = is_p & valid
            is_u = is_u & valid

        fp = is_p.astype(jnp.float32)
        fu = is_u.astype(jnp.float32)

        # Stable BCEWithLogitsLoss (reduction='none'):
        #   target=1 -> softplus(-x),  target=0 -> softplus(x)
        e = jnp.exp(-jnp.abs(x))
        sp_neg = jnp.maximum(-x, 0.0) + jnp.log1p(e)      # softplus(-x)
        sp_pos = sp_neg + x                               # softplus(x)

        if use_adaptive:
            # 1 - sigmoid(x) reusing e = exp(-|x|):
            #   x >= 0 -> e/(1+e),   x < 0 -> 1/(1+e)
            one_minus_sig = jnp.where(x >= 0.0, e, 1.0) / (1.0 + e)
            ap = jnp.maximum(one_minus_sig, eps)
            if gamma == 1.0:
                ap_pow = ap
            elif gamma == 2.0:
                ap_pow = ap * ap
            elif gamma == 3.0:
                ap_pow = ap * ap * ap
            elif gamma == 4.0:
                sq = ap * ap
                ap_pow = sq * sq
            else:
                ap_pow = ap ** gamma
            u_vals = (base_w + (1.0 - base_w) * ap_pow) * sp_pos
        else:
            u_vals = sp_pos

        # Fold (block_rows, 128) -> (8, 128): pure vreg adds (no cross-lane).
        def fold(v):
            return v.reshape(block_rows // SUBLANES, SUBLANES, LANES).sum(axis=0)

        # out_ref block shape: (1, 5, 8, 128) — per-core partial accumulators.
        out_ref[0, 0] += fold(jnp.where(is_p, sp_neg, 0.0))   # sum BCE(p, 1)
        out_ref[0, 1] += fold(jnp.where(is_p, sp_pos, 0.0))   # sum BCE(p, 0)
        out_ref[0, 2] += fold(jnp.where(is_u, u_vals, 0.0))   # sum w_u*BCE(u,0)
        out_ref[0, 3] += fold(fp)                             # num_p
        out_ref[0, 4] += fold(fu)                             # num_u


def pu_loss_pallas(logits, pu_labels, prior, gamma=1.0,
                   use_adaptive_term=False, adaptive_epsilon=1e-6,
                   adaptive_base_weight=0.0, max_block_rows=MAX_BLOCK_ROWS):
    assert logits.ndim == 1 and pu_labels.shape == logits.shape
    n = logits.shape[0]

    x = logits.astype(jnp.float32)
    y = pu_labels.astype(jnp.float32)

    # Only pad the tail up to one (8,128) tile.  Padded labels use a sentinel
    # (-1.0) so they are neither positive nor unlabeled -> no per-element
    # validity mask is needed for the padding.
    rem = n % TILE
    if rem != 0:
        pad = TILE - rem
        x = jnp.pad(x, (0, pad))
        y = jnp.pad(y, (0, pad), constant_values=-1.0)

    rows = x.shape[0] // LANES                 # multiple of 8
    x2 = x.reshape(rows, LANES)                # free reshape (contiguous)
    y2 = y.reshape(rows, LANES)

    block_rows = min(int(max_block_rows), rows)    # multiple of 8
    nblocks = -(-rows // block_rows)               # ceil
    steps = -(-nblocks // NUM_CORE_SPLITS)         # steps per core split
    needs_row_mask = (rows % block_rows) != 0      # ragged last block?

    def in_map(c, i):
        # Clamp phantom blocks back in range; the kernel skips them entirely
        # via pl.when, so no double counting.
        return (jnp.minimum(c * steps + i, nblocks - 1), 0)

    kernel = functools.partial(
        _pu_kernel,
        total_rows=int(rows),
        block_rows=block_rows,
        steps_per_core=steps,
        needs_row_mask=bool(needs_row_mask),
        use_adaptive=bool(use_adaptive_term),
        gamma=float(gamma),
        eps=float(adaptive_epsilon),
        base_w=float(adaptive_base_weight),
    )

    partials = pl.pallas_call(
        kernel,
        out_shape=jax.ShapeDtypeStruct((NUM_CORE_SPLITS, 5, SUBLANES, LANES),
                                       jnp.float32),
        grid_spec=pltpu.PrefetchScalarGridSpec(
            num_scalar_prefetch=0,
            grid=(NUM_CORE_SPLITS, steps),
            in_specs=[
                pl.BlockSpec((block_rows, LANES), in_map),
                pl.BlockSpec((block_rows, LANES), in_map),
            ],
            out_specs=pl.BlockSpec((1, 5, SUBLANES, LANES),
                                   lambda c, i: (c, 0, 0, 0)),
        ),
        compiler_params=pltpu.CompilerParams(
            dimension_semantics=("parallel", "arbitrary")),
    )(x2, y2)

    # Tiny epilogue in plain JAX: reduce per-core partial tiles to 5 scalars
    # and apply the nnPU scalar glue (means, clamp, edge cases).
    sums = jnp.sum(partials, axis=(0, 2, 3))       # (5,)
    sum_pp, sum_pm, sum_u, num_p, num_u = (
        sums[0], sums[1], sums[2], sums[3], sums[4])

    prior = jnp.float32(prior)
    safe_p = jnp.maximum(num_p, 1.0)
    safe_u = jnp.maximum(num_u, 1.0)
    risk_p_plus = jnp.where(num_p > 0, sum_pp / safe_p, 0.0)
    risk_p_minus = jnp.where(num_p > 0, sum_pm / safe_p, 0.0)
    risk_u = jnp.where(num_u > 0, sum_u / safe_u, 0.0)

    neg_risk = risk_u - prior * risk_p_minus
    full_loss = prior * risk_p_plus + jnp.maximum(0.0, neg_risk)

    # torch control flow:
    #   num_u == 0 and num_p > 0  ->  prior * risk_p_plus
    #   num_u == 0 and num_p == 0 ->  0.0
    loss = jnp.where(num_u == 0,
                     jnp.where(num_p > 0, prior * risk_p_plus, 0.0),
                     full_loss)
    return loss


def pu_loss_ref(logits, pu_labels, prior, gamma=1.0,
                use_adaptive_term=False, adaptive_epsilon=1e-6,
                adaptive_base_weight=0.0):
    """Pure-JAX reference for correctness checking."""
    x = logits.astype(jnp.float32)
    y = pu_labels.astype(jnp.float32)
    is_p = (y == 1.0)
    is_u = (y == 0.0)
    sp_neg = jnp.maximum(-x, 0.0) + jnp.log1p(jnp.exp(-jnp.abs(x)))
    sp_pos = sp_neg + x
    num_p = jnp.sum(is_p.astype(jnp.float32))
    num_u = jnp.sum(is_u.astype(jnp.float32))
    if use_adaptive_term:
        w_u = adaptive_base_weight + (1.0 - adaptive_base_weight) * (
            jnp.maximum(1.0 - jax.nn.sigmoid(x), adaptive_epsilon) ** gamma)
    else:
        w_u = jnp.ones_like(x)
    rpp = jnp.where(num_p > 0,
                    jnp.sum(jnp.where(is_p, sp_neg, 0.0)) / jnp.maximum(num_p, 1.0), 0.0)
    rpm = jnp.where(num_p > 0,
                    jnp.sum(jnp.where(is_p, sp_pos, 0.0)) / jnp.maximum(num_p, 1.0), 0.0)
    ru = jnp.where(num_u > 0,
                   jnp.sum(jnp.where(is_u, w_u * sp_pos, 0.0)) / jnp.maximum(num_u, 1.0), 0.0)
    neg_risk = ru - prior * rpm
    full = prior * rpp + jnp.maximum(0.0, neg_risk)
    return jnp.where(num_u == 0, jnp.where(num_p > 0, prior * rpp, 0.0), full)


if __name__ == "__main__":
    key = jax.random.PRNGKey(0)
    k1, k2, k3, k4, k5, k6, k7, k8 = jax.random.split(key, 8)
    prior = 0.3

    # Case 1: small N (pads to one tile internally), standard nnPU.
    N1 = 256
    logits1 = jax.random.normal(k1, (N1,), dtype=jnp.float32) * 2.0
    labels1 = (jax.random.uniform(k2, (N1,)) < prior).astype(jnp.float32)
    loss1 = jax.block_until_ready(pu_loss_pallas(logits1, labels1, prior=prior))
    ref1 = jax.block_until_ready(pu_loss_ref(logits1, labels1, prior=prior))
    assert abs(float(loss1) - float(ref1)) < 5e-5, (float(loss1), float(ref1))

    # Case 2: ragged N + tiny block to exercise multi-step grid, both core
    # splits and the adaptive (beta) path with the gamma==2 fast path.
    N2 = 3000
    logits2 = jax.random.normal(k3, (N2,), dtype=jnp.float32) * 3.0
    labels2 = (jax.random.uniform(k4, (N2,)) < prior).astype(jnp.float32)
    loss2 = jax.block_until_ready(
        pu_loss_pallas(logits2, labels2, prior=prior, gamma=2.0,
                       use_adaptive_term=True, adaptive_base_weight=0.1,
                       max_block_rows=8))
    ref2 = jax.block_until_ready(
        pu_loss_ref(logits2, labels2, prior=prior, gamma=2.0,
                    use_adaptive_term=True, adaptive_base_weight=0.1))
    assert abs(float(loss2) - float(ref2)) < 5e-5, (float(loss2), float(ref2))

    # Case 3: N multiple of 1024 (no padding at all), one block per core.
    N3 = 4096
    logits3 = jax.random.normal(k5, (N3,), dtype=jnp.float32)
    labels3 = (jax.random.uniform(k6, (N3,)) < prior).astype(jnp.float32)
    loss3 = jax.block_until_ready(
        pu_loss_pallas(logits3, labels3, prior=prior, max_block_rows=16))
    ref3 = jax.block_until_ready(pu_loss_ref(logits3, labels3, prior=prior))
    assert abs(float(loss3) - float(ref3)) < 5e-5, (float(loss3), float(ref3))

    # Case 4: ragged last block (block_rows does not divide the padded rows)
    # to exercise the in-kernel row-mask path + a phantom block on core 1.
    N4 = 2500
    logits4 = jax.random.normal(k7, (N4,), dtype=jnp.float32) * 1.5
    labels4 = (jax.random.uniform(k8, (N4,)) < prior).astype(jnp.float32)
    loss4 = jax.block_until_ready(
        pu_loss_pallas(logits4, labels4, prior=prior, max_block_rows=16))
    ref4 = jax.block_until_ready(pu_loss_ref(logits4, labels4, prior=prior))
    assert abs(float(loss4) - float(ref4)) < 5e-5, (float(loss4), float(ref4))

    print("KERNEL_OK")
</pallas_src>

<mosaic_0001>
module attributes {stable_mosaic.version = 11 : i64} {
  func.func @_pu_kernel(%arg0: i32, %arg1: i32, %arg2: memref<8x128xf32, #tpu.memory_space<vmem>>, %arg3: memref<8x128xf32, #tpu.memory_space<vmem>>, %arg4: memref<1x5x8x128xf32, #tpu.memory_space<vmem>>) attributes {dimension_semantics = [#tpu.dimension_semantics<parallel>, #tpu.dimension_semantics<arbitrary>], iteration_bounds = array<i64: 2, 1>, scalar_prefetch = 0 : i64, scratch_operands = 0 : i64, tpu.core_type = #tpu.core_type<tc>, window_params = [{transform_indices = @transform_0, window_bounds = array<i64: 8, 128>}, {transform_indices = @transform_1, window_bounds = array<i64: 8, 128>}, {transform_indices = @transform_2, window_bounds = array<i64: 1, 5, 8, 128>}]} {
    %c0_i32 = arith.constant 0 : i32
    %0 = arith.cmpi eq, %arg1, %c0_i32 : i32
    %1 = arith.extui %0 : i1 to i32
    %c0_i32_0 = arith.constant 0 : i32
    %2 = arith.cmpi ne, %1, %c0_i32_0 : i32
    scf.if %2 {
      %cst = arith.constant 0.000000e+00 : f32
      %9 = vector.broadcast %cst : f32 to vector<1x5x8x128xf32>
      %c0 = arith.constant 0 : index
      %c0_3 = arith.constant 0 : index
      %c0_4 = arith.constant 0 : index
      %c0_5 = arith.constant 0 : index
      %10 = vector.load %arg4[%c0, %c0_3, %c0_4, %c0_5] : memref<1x5x8x128xf32, #tpu.memory_space<vmem>>, vector<1x5x8x128xf32>
      tpu.vector_store %arg4[%c0, %c0_3, %c0_4, %c0_5], %9 {strides = array<i32>} : memref<1x5x8x128xf32, #tpu.memory_space<vmem>>, vector<1x5x8x128xf32>,
    } else {
    }
    %c1_i32 = arith.constant 1 : i32
    %3 = arith.muli %arg0, %c1_i32 : i32
    %4 = arith.addi %3, %arg1 : i32
    %c8_i32 = arith.constant 8 : i32
    %5 = arith.muli %4, %c8_i32 : i32
    %c8_i32_1 = arith.constant 8 : i32
    %6 = arith.cmpi slt, %5, %c8_i32_1 : i32
    %7 = arith.extui %6 : i1 to i32
    %c0_i32_2 = arith.constant 0 : i32
    %8 = arith.cmpi ne, %7, %c0_i32_2 : i32
    scf.if %8 {
      %c0 = arith.constant 0 : index
      %c0_3 = arith.constant 0 : index
      %9 = vector.load %arg2[%c0, %c0_3] : memref<8x128xf32, #tpu.memory_space<vmem>>, vector<8x128xf32>
      %c0_4 = arith.constant 0 : index
      %c0_5 = arith.constant 0 : index
      %10 = vector.load %arg3[%c0_4, %c0_5] : memref<8x128xf32, #tpu.memory_space<vmem>>, vector<8x128xf32>
      %cst = arith.constant 1.000000e+00 : f32
      %11 = vector.broadcast %cst : f32 to vector<8x128xf32>
      %12 = arith.cmpf oeq, %10, %11 : vector<8x128xf32>
      %cst_6 = arith.constant 0.000000e+00 : f32
      %13 = vector.broadcast %cst_6 : f32 to vector<8x128xf32>
      %14 = arith.cmpf oeq, %10, %13 : vector<8x128xf32>
      %15 = arith.extui %12 : vector<8x128xi1> to vector<8x128xi32>
      %16 = arith.sitofp %15 : vector<8x128xi32> to vector<8x128xf32>
      %17 = arith.extui %14 : vector<8x128xi1> to vector<8x128xi32>
      %18 = arith.sitofp %17 : vector<8x128xi32> to vector<8x128xf32>
      %19 = math.absf %9 : vector<8x128xf32>
      %cst_7 = arith.constant 0.000000e+00 : f32
      %20 = vector.broadcast %cst_7 : f32 to vector<8x128xf32>
      %21 = arith.subf %20, %19 : vector<8x128xf32>
      %22 = math.exp %21 : vector<8x128xf32>
      %cst_8 = arith.constant 0.000000e+00 : f32
      %23 = vector.broadcast %cst_8 : f32 to vector<8x128xf32>
      %24 = arith.subf %23, %9 : vector<8x128xf32>
      %cst_9 = arith.constant 0.000000e+00 : f32
      %25 = vector.broadcast %cst_9 : f32 to vector<8x128xf32>
      %26 = arith.maximumf %24, %25 : vector<8x128xf32>
      %27 = math.log1p %22 : vector<8x128xf32>
      %28 = arith.addf %26, %27 : vector<8x128xf32>
      %29 = arith.addf %28, %9 : vector<8x128xf32>
      %c0_10 = arith.constant 0 : index
      %c0_11 = arith.constant 0 : index
      %c0_12 = arith.constant 0 : index
      %c0_13 = arith.constant 0 : index
      %30 = vector.load %arg4[%c0_10, %c0_11, %c0_12, %c0_13] : memref<1x5x8x128xf32, #tpu.memory_space<vmem>>, vector<1x1x8x128xf32>
      %31 = vector.shape_cast %30 : vector<1x1x8x128xf32> to vector<8x128xf32>
      %cst_14 = arith.constant 0.000000e+00 : f32
      %32 = vector.broadcast %cst_14 : f32 to vector<8x128xf32>
      %33 = arith.select %12, %28, %32 : vector<8x128xi1>, vector<8x128xf32>
      %34 = vector.shape_cast %33 : vector<8x128xf32> to vector<1x8x128xf32>
      %cst_15 = arith.constant dense<0.000000e+00> : vector<8x128xf32>
      %35 = vector.multi_reduction <add>, %34, %cst_15 [0] : vector<1x8x128xf32> to vector<8x128xf32>
      %36 = arith.addf %31, %35 : vector<8x128xf32>
      %c0_16 = arith.constant 0 : index
      %c0_17 = arith.constant 0 : index
      %c0_18 = arith.constant 0 : index
      %c0_19 = arith.constant 0 : index
      %37 = vector.load %arg4[%c0_16, %c0_17, %c0_18, %c0_19] : memref<1x5x8x128xf32, #tpu.memory_space<vmem>>, vector<1x1x8x128xf32>
      %38 = vector.shape_cast %37 : vector<1x1x8x128xf32> to vector<8x128xf32>
      %39 = vector.shape_cast %36 : vector<8x128xf32> to vector<1x1x8x128xf32>
      tpu.vector_store %arg4[%c0_16, %c0_17, %c0_18, %c0_19], %39 {strides = array<i32>} : memref<1x5x8x128xf32, #tpu.memory_space<vmem>>, vector<1x1x8x128xf32>,
      %c0_20 = arith.constant 0 : index
      %c1 = arith.constant 1 : index
      %c0_21 = arith.constant 0 : index
      %c0_22 = arith.constant 0 : index
      %40 = vector.load %arg4[%c0_20, %c1, %c0_21, %c0_22] : memref<1x5x8x128xf32, #tpu.memory_space<vmem>>, vector<1x1x8x128xf32>
      %41 = vector.shape_cast %40 : vector<1x1x8x128xf32> to vector<8x128xf32>
      %cst_23 = arith.constant 0.000000e+00 : f32
      %42 = vector.broadcast %cst_23 : f32 to vector<8x128xf32>
      %43 = arith.select %12, %29, %42 : vector<8x128xi1>, vector<8x128xf32>
      %44 = vector.shape_cast %43 : vector<8x128xf32> to vector<1x8x128xf32>
      %cst_24 = arith.constant dense<0.000000e+00> : vector<8x128xf32>
      %45 = vector.multi_reduction <add>, %44, %cst_24 [0] : vector<1x8x128xf32> to vector<8x128xf32>
      %46 = arith.addf %41, %45 : vector<8x128xf32>
      %c0_25 = arith.constant 0 : index
      %c1_26 = arith.constant 1 : index
      %c0_27 = arith.constant 0 : index
      %c0_28 = arith.constant 0 : index
      %47 = vector.load %arg4[%c0_25, %c1_26, %c0_27, %c0_28] : memref<1x5x8x128xf32, #tpu.memory_space<vmem>>, vector<1x1x8x128xf32>
      %48 = vector.shape_cast %47 : vector<1x1x8x128xf32> to vector<8x128xf32>
      %49 = vector.shape_cast %46 : vector<8x128xf32> to vector<1x1x8x128xf32>
      tpu.vector_store %arg4[%c0_25, %c1_26, %c0_27, %c0_28], %49 {strides = array<i32>} : memref<1x5x8x128xf32, #tpu.memory_space<vmem>>, vector<1x1x8x128xf32>,
      %c0_29 = arith.constant 0 : index
      %c2 = arith.constant 2 : index
      %c0_30 = arith.constant 0 : index
      %c0_31 = arith.constant 0 : index
      %50 = vector.load %arg4[%c0_29, %c2, %c0_30, %c0_31] : memref<1x5x8x128xf32, #tpu.memory_space<vmem>>, vector<1x1x8x128xf32>
      %51 = vector.shape_cast %50 : vector<1x1x8x128xf32> to vector<8x128xf32>
      %cst_32 = arith.constant 0.000000e+00 : f32
      %52 = vector.broadcast %cst_32 : f32 to vector<8x128xf32>
      %53 = arith.select %14, %29, %52 : vector<8x128xi1>, vector<8x128xf32>
      %54 = vector.shape_cast %53 : vector<8x128xf32> to vector<1x8x128xf32>
      %cst_33 = arith.constant dense<0.000000e+00> : vector<8x128xf32>
      %55 = vector.multi_reduction <add>, %54, %cst_33 [0] : vector<1x8x128xf32> to vector<8x128xf32>
      %56 = arith.addf %51, %55 : vector<8x128xf32>
      %c0_34 = arith.constant 0 : index
      %c2_35 = arith.constant 2 : index
      %c0_36 = arith.constant 0 : index
      %c0_37 = arith.constant 0 : index
      %57 = vector.load %arg4[%c0_34, %c2_35, %c0_36, %c0_37] : memref<1x5x8x128xf32, #tpu.memory_space<vmem>>, vector<1x1x8x128xf32>
      %58 = vector.shape_cast %57 : vector<1x1x8x128xf32> to vector<8x128xf32>
      %59 = vector.shape_cast %56 : vector<8x128xf32> to vector<1x1x8x128xf32>
      tpu.vector_store %arg4[%c0_34, %c2_35, %c0_36, %c0_37], %59 {strides = array<i32>} : memref<1x5x8x128xf32, #tpu.memory_space<vmem>>, vector<1x1x8x128xf32>,
      %c0_38 = arith.constant 0 : index
      %c3 = arith.constant 3 : index
      %c0_39 = arith.constant 0 : index
      %c0_40 = arith.constant 0 : index
      %60 = vector.load %arg4[%c0_38, %c3, %c0_39, %c0_40] : memref<1x5x8x128xf32, #tpu.memory_space<vmem>>, vector<1x1x8x128xf32>
      %61 = vector.shape_cast %60 : vector<1x1x8x128xf32> to vector<8x128xf32>
      %62 = vector.shape_cast %16 : vector<8x128xf32> to vector<1x8x128xf32>
      %cst_41 = arith.constant dense<0.000000e+00> : vector<8x128xf32>
      %63 = vector.multi_reduction <add>, %62, %cst_41 [0] : vector<1x8x128xf32> to vector<8x128xf32>
      %64 = arith.addf %61, %63 : vector<8x128xf32>
      %c0_42 = arith.constant 0 : index
      %c3_43 = arith.constant 3 : index
      %c0_44 = arith.constant 0 : index
      %c0_45 = arith.constant 0 : index
      %65 = vector.load %arg4[%c0_42, %c3_43, %c0_44, %c0_45] : memref<1x5x8x128xf32, #tpu.memory_space<vmem>>, vector<1x1x8x128xf32>
      %66 = vector.shape_cast %65 : vector<1x1x8x128xf32> to vector<8x128xf32>
      %67 = vector.shape_cast %64 : vector<8x128xf32> to vector<1x1x8x128xf32>
      tpu.vector_store %arg4[%c0_42, %c3_43, %c0_44, %c0_45], %67 {strides = array<i32>} : memref<1x5x8x128xf32, #tpu.memory_space<vmem>>, vector<1x1x8x128xf32>,
      %c0_46 = arith.constant 0 : index
      %c4 = arith.constant 4 : index
      %c0_47 = arith.constant 0 : index
      %c0_48 = arith.constant 0 : index
      %68 = vector.load %arg4[%c0_46, %c4, %c0_47, %c0_48] : memref<1x5x8x128xf32, #tpu.memory_space<vmem>>, vector<1x1x8x128xf32>
      %69 = vector.shape_cast %68 : vector<1x1x8x128xf32> to vector<8x128xf32>
      %70 = vector.shape_cast %18 : vector<8x128xf32> to vector<1x8x128xf32>
      %cst_49 = arith.constant dense<0.000000e+00> : vector<8x128xf32>
      %71 = vector.multi_reduction <add>, %70, %cst_49 [0] : vector<1x8x128xf32> to vector<8x128xf32>
      %72 = arith.addf %69, %71 : vector<8x128xf32>
      %c0_50 = arith.constant 0 : index
      %c4_51 = arith.constant 4 : index
      %c0_52 = arith.constant 0 : index
      %c0_53 = arith.constant 0 : index
      %73 = vector.load %arg4[%c0_50, %c4_51, %c0_52, %c0_53] : memref<1x5x8x128xf32, #tpu.memory_space<vmem>>, vector<1x1x8x128xf32>
      %74 = vector.shape_cast %73 : vector<1x1x8x128xf32> to vector<8x128xf32>
      %75 = vector.shape_cast %72 : vector<8x128xf32> to vector<1x1x8x128xf32>
      tpu.vector_store %arg4[%c0_50, %c4_51, %c0_52, %c0_53], %75 {strides = array<i32>} : memref<1x5x8x128xf32, #tpu.memory_space<vmem>>, vector<1x1x8x128xf32>,
    } else {
    }
    return
  }
  func.func @transform_0(%arg0: i32, %arg1: i32) -> (i32, i32) {
    %c1_i32 = arith.constant 1 : i32
    %0 = arith.muli %arg0, %c1_i32 : i32
    %1 = arith.addi %0, %arg1 : i32
    %c0_i32 = arith.constant 0 : i32
    %2 = arith.minsi %1, %c0_i32 : i32
    %c0_i32_0 = arith.constant 0 : i32
    %c0_i32_1 = arith.constant 0 : i32
    return %2, %c0_i32_0 : i32, i32
  }
  func.func @transform_1(%arg0: i32, %arg1: i32) -> (i32, i32) {
    %c1_i32 = arith.constant 1 : i32
    %0 = arith.muli %arg0, %c1_i32 : i32
    %1 = arith.addi %0, %arg1 : i32
    %c0_i32 = arith.constant 0 : i32
    %2 = arith.minsi %1, %c0_i32 : i32
    %c0_i32_0 = arith.constant 0 : i32
    %c0_i32_1 = arith.constant 0 : i32
    return %2, %c0_i32_0 : i32, i32
  }
  func.func @transform_2(%arg0: i32, %arg1: i32) -> (i32, i32, i32, i32) {
    %c0_i32 = arith.constant 0 : i32
    %c0_i32_0 = arith.constant 0 : i32
    %c0_i32_1 = arith.constant 0 : i32
    %c0_i32_2 = arith.constant 0 : i32
    return %arg0, %c0_i32, %c0_i32_0, %c0_i32_1 : i32, i32, i32, i32
  }
}

</mosaic_0001>

<llo_original>
// kernel: tpu_custom_call.1
$region0: #{tpu_custom_call.1}
  #allocation0 [shape = 'u32[]', space=smem, size = 0x4, offset = 0x4, fixed_abs, tag = 'smem constant byte address 0x4 - core index']
  #allocation1 [shape = 'u32[144,128]{1,0:T(1,128)}', space=vmem, size = 0x12000, scoped, tag = 'internal scratch']
  %s0 = inlined_call_operand.hbm [shape: f32[8,128], index: 0, kind: input, shape index: {}]
  %s1 = inlined_call_operand.hbm [shape: f32[8,128], index: 1, kind: input, shape index: {}]
  %s2 = inlined_call_operand.hbm [shape: f32[2,5,8,128], index: 2, kind: output, shape index: {}]
  %s3 = sld [smem:[#allocation0]]
  $region57: #{tpu_custom_call.1} parent=0
    _
  %s5 = ssub.s32 1, %s3
  %s6 = scalar_select 0, %s5, %s3
  $region1: #{tpu_custom_call.1} parent=0
    #allocation2 [shape = 'u8[8192]{0}', space=vmem, size = 0x2000, scoped, tag = 'input window, operand 0']
    #allocation3 [shape = 's32[2]{0}', space=sflag, size = 0x8, scoped, tag = 'scoped memory for tpu_custom_call.1']
    #allocation4 [shape = 's32[2]{0}', space=sflag, size = 0x8, scoped, tag = 'scoped memory for tpu_custom_call.1']
    #allocation5 [shape = 'u8[8192]{0}', space=vmem, size = 0x2000, scoped, tag = 'input window, operand 1']
    #allocation6 [shape = 's32[2]{0}', space=sflag, size = 0x8, scoped, tag = 'scoped memory for tpu_custom_call.1']
    #allocation7 [shape = 'u8[40960]{0}', space=vmem, size = 0xa000, scoped, tag = 'output window, operand 0']
    %7 = vsyncpa [#allocation3], 0
    %s8 = scalar_lea.sflag [#allocation3], 1
    %9 = vsyncpa %s8, 0
    %10 = vsyncpa [#allocation6], 0
    %s11 = scalar_lea.sflag [#allocation6], 1
    %12 = vsyncpa %s11, 0
    %13 = vsyncpa [#allocation4], 0
    %s14 = scalar_lea.sflag [#allocation4], 1
    %15 = vsyncpa %s14, 0
    loop: start=0, step=1, limit=4
    $region2: #{tpu_custom_call.1} parent=1 // loop_pre_header
      _
    $region3: #{tpu_custom_call.1} parent=1 // loop_header
      %s17 = sphi 0, %s21
      %p18 = scmp.ge.s32.totalorder %s17, 4
      %s24 = sphi 0, %s36
      %s25 = sphi 0, %s32
      %s26 = sphi 0, %s24
      %s27 = sphi 0, %s25
      %s28 = sphi 0, %s26
      %s29 = sphi 0, %s27
      %s45 = sphi 0, %s47
      %s48 = sphi 0, %s45
      %s49 = sphi 0, %s48
      %s65 = sphi 0, %s49
      %s77 = sphi 0, %s79
      %s80 = sphi 0, %s77
      %s81 = sphi 0, %s80
      %s97 = sphi 0, %s81
      %s103 = sphi 0, %s105
      %s106 = sphi 0, %s103
      %s107 = sphi 0, %s106
      %s123 = sphi 0, %s107
    $region4: #{tpu_custom_call.1} parent=1 // loop_header_branch
      %20 = sbr.rel (%p18) target = $region8
    $region5: #{tpu_custom_call.1} parent=1 // loop_body
      %s22 = ssub.s32 %s17, 1
      %s23 = ssub.s32 %s17, 2
      %s30 = sadd.s32 1, %s25
      %p31 = scmp.ge.s32.totalorder %s30, 1
      %s32 = scalar_select %p31, 0, %s30
      %s33 = sadd.s32 1, %s24
      %s34 = scalar_select %p31, %s33, %s24
      %p35 = scmp.ge.s32.totalorder %s34, 2
      %s36 = scalar_select %p35, 0, %s34
      %s37 = sadd.s32 %s24, %s25
      %p38 = scmp.lt.s32.totalorder %s37, 0
      %s39 = scalar_select %p38, %s37, 0
      %s40 = sadd.s32 %s36, %s32
      %p41 = scmp.lt.s32.totalorder %s40, 0
      %s42 = scalar_select %p41, %s40, 0
      %s43 = ssub.s32 %s39, %s42
      %p44 = scmp.eq.s32.totalorder %s43, 0
      %s46 = sadd.s32 %s45, 1
      %s47 = scalar_select %p44, %s45, %s46
      %p50 = pneg %p44
      %p51 = scmp.eq.s32.totalorder %s17, 1
      %p52 = por %p50, %p51
      %p53 = scmp.ne.s32.totalorder %s45, %s48
      %p54 = scmp.eq.s32.totalorder %s17, 0
      %p55 = por %p53, %p54
      %p56 = scmp.ne.s32.totalorder %s45, %s48
      %p57 = scmp.eq.s32.totalorder %s22, 1
      %p58 = por %p56, %p57
      %p59 = scmp.ne.s32.totalorder %s48, %s49
      %p60 = scmp.eq.s32.totalorder %s22, 0
      %p61 = por %p59, %p60
      %p62 = scmp.ne.s32.totalorder %s48, %s49
      %p63 = scmp.eq.s32.totalorder %s23, 1
      %p64 = por %p62, %p63
      %p66 = scmp.ne.s32.totalorder %s49, %s65
      %p67 = scmp.eq.s32.totalorder %s23, 0
      %p68 = por %p66, %p67
      %s69 = sadd.s32 %s24, %s25
      %p70 = scmp.lt.s32.totalorder %s69, 0
      %s71 = scalar_select %p70, %s69, 0
      %s72 = sadd.s32 %s36, %s32
      %p73 = scmp.lt.s32.totalorder %s72, 0
      %s74 = scalar_select %p73, %s72, 0
      %s75 = ssub.s32 %s71, %s74
      %p76 = scmp.eq.s32.totalorder %s75, 0
      %s78 = sadd.s32 %s77, 1
      %s79 = scalar_select %p76, %s77, %s78
      %p82 = pneg %p76
      %p83 = scmp.eq.s32.totalorder %s17, 1
      %p84 = por %p82, %p83
      %p85 = scmp.ne.s32.totalorder %s77, %s80
      %p86 = scmp.eq.s32.totalorder %s17, 0
      %p87 = por %p85, %p86
      %p88 = scmp.ne.s32.totalorder %s77, %s80
      %p89 = scmp.eq.s32.totalorder %s22, 1
      %p90 = por %p88, %p89
      %p91 = scmp.ne.s32.totalorder %s80, %s81
      %p92 = scmp.eq.s32.totalorder %s22, 0
      %p93 = por %p91, %p92
      %p94 = scmp.ne.s32.totalorder %s80, %s81
      %p95 = scmp.eq.s32.totalorder %s23, 1
      %p96 = por %p94, %p95
      %p98 = scmp.ne.s32.totalorder %s81, %s97
      %p99 = scmp.eq.s32.totalorder %s23, 0
      %p100 = por %p98, %p99
      %s101 = ssub.s32 %s24, %s36
      %p102 = scmp.eq.s32.totalorder %s101, 0
      %s104 = sadd.s32 %s103, 1
      %s105 = scalar_select %p102, %s103, %s104
      %p108 = pneg %p102
      %p109 = scmp.eq.s32.totalorder %s17, 1
      %p110 = por %p108, %p109
      %p111 = scmp.ne.s32.totalorder %s103, %s106
      %p112 = scmp.eq.s32.totalorder %s17, 0
      %p113 = por %p111, %p112
      %p114 = scmp.ne.s32.totalorder %s103, %s106
      %p115 = scmp.eq.s32.totalorder %s22, 1
      %p116 = por %p114, %p115
      %p117 = scmp.ne.s32.totalorder %s106, %s107
      %p118 = scmp.eq.s32.totalorder %s22, 0
      %p119 = por %p117, %p118
      %p120 = scmp.ne.s32.totalorder %s106, %s107
      %p121 = scmp.eq.s32.totalorder %s23, 1
      %p122 = por %p120, %p121
      %p124 = scmp.ne.s32.totalorder %s107, %s123
      %p125 = scmp.eq.s32.totalorder %s23, 0
      %p126 = por %p124, %p125
      %p127 = scmp.le.s32.totalorder 1, %s17
      %p128 = scmp.lt.s32.totalorder %s17, 3
      %p129 = pnand %p127, %p128
      %p130 = pneg %p129
      // Predicated region
      $region9: #{tpu_custom_call.1} parent=5 // pred_check
        _
      $region10: #{tpu_custom_call.1} parent=5 // pred_check_branch
        %132 = sbr.rel (%p129) target = $region12
      $region11: #{tpu_custom_call.1} parent=5 // pred_region
        %s133 = ssub.s32 %s17, 1
      $region12: #{tpu_custom_call.1} parent=5 // pred_fallthru
        _
      %p134 = scmp.lt.s32.totalorder %s17, 2
      // Predicated region
      $region13: #{tpu_custom_call.1} parent=5 // pred_check
        %p135 = pneg %p134
      $region14: #{tpu_custom_call.1} parent=5 // pred_check_branch
        %137 = sbr.rel (%p135) target = $region16
      $region15: #{tpu_custom_call.1} parent=5 // pred_region
        // Predicated region
        $region17: #{tpu_custom_call.1} parent=15 // pred_check
          %p138 = pneg %p55
        $region18: #{tpu_custom_call.1} parent=15 // pred_check_branch
          %140 = sbr.rel (%p138) target = $region20
        $region19: #{tpu_custom_call.1} parent=15 // pred_region
          %s141 = sand.u32 %s45, 1
          %s142 = scalar_lea.sflag [#allocation3], %s141
          %s143 = sand.u32 %s45, 1
          %s144 = smul.addr %s143, 8
          %s145 = scalar_lea.vmem [#allocation2], %s144
          %s146 = sadd.s32 %s24, %s25
          %p147 = scmp.lt.s32.totalorder %s146, 0
          %s148 = scalar_select %p147, %s146, 0
          %s150 = ssub.s32 128, 128
          %151 = vsyncadd %s142, %s150
          %s152 = smul.addr %s148, 128
          %s153 = scalar_lea.hbm %s0, %s152
          %s155 = sshll.u32 %s145, 4
          %s156 = int_to_ptr.vmem [resolvable:$true] %s155
          %158 = dma.hbm_to_vmem [thread:$0]  %s153, 128, %s156, %s142
        $region20: #{tpu_custom_call.1} parent=15 // pred_fallthru
          _
        // Predicated region
        $region21: #{tpu_custom_call.1} parent=15 // pred_check
          %p159 = pneg %p87
        $region22: #{tpu_custom_call.1} parent=15 // pred_check_branch
          %161 = sbr.rel (%p159) target = $region24
        $region23: #{tpu_custom_call.1} parent=15 // pred_region
          %s162 = sand.u32 %s77, 1
          %s163 = scalar_lea.sflag [#allocation6], %s162
          %s164 = sand.u32 %s77, 1
          %s165 = smul.addr %s164, 8
          %s166 = scalar_lea.vmem [#allocation5], %s165
          %s167 = sadd.s32 %s24, %s25
          %p168 = scmp.lt.s32.totalorder %s167, 0
          %s169 = scalar_select %p168, %s167, 0
          %s171 = ssub.s32 128, 128
          %172 = vsyncadd %s163, %s171
          %s173 = smul.addr %s169, 128
          %s174 = scalar_lea.hbm %s1, %s173
          %s176 = sshll.u32 %s166, 4
          %s177 = int_to_ptr.vmem [resolvable:$true] %s176
          %179 = dma.hbm_to_vmem [thread:$0]  %s174, 128, %s177, %s163
        $region24: #{tpu_custom_call.1} parent=15 // pred_fallthru
          _
      $region16: #{tpu_custom_call.1} parent=5 // pred_fallthru
        _
      %p180 = scmp.le.s32.totalorder 1, %s17
      %p181 = scmp.lt.s32.totalorder %s17, 3
      %p182 = pnand %p180, %p181
      %p183 = pneg %p182
      // Predicated region
      $region25: #{tpu_custom_call.1} parent=5 // pred_check
        _
      $region26: #{tpu_custom_call.1} parent=5 // pred_check_branch
        %185 = sbr.rel (%p182) target = $region28
      $region27: #{tpu_custom_call.1} parent=5 // pred_region
        %s186 = ssub.s32 %s17, 1
        %s187 = sand.u32 %s48, 1
        %s188 = scalar_lea.sflag [#allocation3], %s187
        %s189 = sand.u32 %s48, 1
        %s190 = smul.addr %s189, 8
        %s191 = scalar_lea.vmem [#allocation2], %s190
        // Predicated region
        $region29: #{tpu_custom_call.1} parent=27 // pred_check
          %p192 = pneg %p61
        $region30: #{tpu_custom_call.1} parent=27 // pred_check_branch
          %194 = sbr.rel (%p192) target = $region32
        $region31: #{tpu_custom_call.1} parent=27 // pred_region
          %195 = dma.done %s188, 128
        $region32: #{tpu_custom_call.1} parent=27 // pred_fallthru
          _
        %s196 = sand.u32 %s80, 1
        %s197 = scalar_lea.sflag [#allocation6], %s196
        %s198 = sand.u32 %s80, 1
        %s199 = smul.addr %s198, 8
        %s200 = scalar_lea.vmem [#allocation5], %s199
        // Predicated region
        $region33: #{tpu_custom_call.1} parent=27 // pred_check
          %p201 = pneg %p93
        $region34: #{tpu_custom_call.1} parent=27 // pred_check_branch
          %203 = sbr.rel (%p201) target = $region36
        $region35: #{tpu_custom_call.1} parent=27 // pred_region
          %204 = dma.done %s197, 128
        $region36: #{tpu_custom_call.1} parent=27 // pred_fallthru
          _
        %s205 = sand.u32 %s48, 1
        %s206 = scalar_lea.sflag [#allocation3], %s205
        %s207 = sand.u32 %s48, 1
        %s208 = smul.addr %s207, 8
        %s209 = scalar_lea.vmem [#allocation2], %s208
        %p210 = pneg %p61
        %p211 = pneg %p58
        %s212 = sand.u32 %s80, 1
        %s213 = scalar_lea.sflag [#allocation6], %s212
        %s214 = sand.u32 %s80, 1
        %s215 = smul.addr %s214, 8
        %s216 = scalar_lea.vmem [#allocation5], %s215
        %p217 = pneg %p93
        %p218 = pneg %p90
        %p219 = pneg %p119
        %p220 = pneg %p116
        %s221 = sand.u32 %s106, 1
        %s222 = scalar_lea.sflag [#allocation4], %s221
        %s223 = sand.u32 %s106, 1
        %s224 = smul.addr %s223, 40
        %s225 = scalar_lea.vmem [#allocation7], %s224
        %s226 = sadd.s32 %s26, %s27
        %p227 = scmp.lt.s32.totalorder %s226, 0
        %s228 = scalar_select %p227, %s226, 0
        %s229 = sadd.s32 %s26, %s27
        %p230 = scmp.lt.s32.totalorder %s229, 0
        %s231 = scalar_select %p230, %s229, 0
        %p232 = scmp.eq.s32.totalorder %s27, 0
        // Predicated region
        $region37: #{tpu_custom_call.1} parent=27 // pred_check
          %p233 = pneg %p232
        $region38: #{tpu_custom_call.1} parent=27 // pred_check_branch
          %235 = sbr.rel (%p233) target = $region40
        $region39: #{tpu_custom_call.1} parent=27 // pred_region
          %236 = vst [vmem:[%s225] sm:$0xff] 0.0
          %237 = vst [vmem:[%s225 + $0x8] sm:$0xff] 0.0
          %238 = vst [vmem:[%s225 + $0x10] sm:$0xff] 0.0
          %239 = vst [vmem:[%s225 + $0x18] sm:$0xff] 0.0
          %240 = vst [vmem:[%s225 + $0x20] sm:$0xff] 0.0
        $region40: #{tpu_custom_call.1} parent=27 // pred_fallthru
          _
        %s241 = sadd.s32 %s26, %s27
        %s242 = smul.u32 %s241, 8
        %p243 = scmp.lt.s32.totalorder %s242, 8
        // Predicated region
        $region41: #{tpu_custom_call.1} parent=27 // pred_check
          %p244 = pneg %p243
        $region42: #{tpu_custom_call.1} parent=27 // pred_check_branch
          %246 = sbr.rel (%p244) target = $region44
        $region43: #{tpu_custom_call.1} parent=27 // pred_region
          %v247 = vld [vmem:[%s191] sm:$0xff]
          %v248 = vld [vmem:[%s200] sm:$0xff]
          %vm249 = vcmp.eq.f32.partialorder %v248, 1.0
          %vm250 = vcmp.eq.f32.partialorder %v248, 0.0
          %v251 = vsel %vm249, 1, 0
          %v252 = vcvt.s32.f32 %v251
          %v253 = vsel %vm250, 1, 0
          %v254 = vcvt.s32.f32 %v253
          %v255 = vand.u32 2147483647, %v247
          %v256 = vsub.f32 0.0, %v255
          %v257 = vmul.f32 %v256, 1.442695
          %v258 = vpow.pop %v257
          %v259 = vsub.f32 0.0, %v247
          %v260 = vmax.f32 %v259, 0.0
          %v261 = vadd.f32 %v258, 1.0
          %v262 = vlog2.pop %v261
          %v263 = vmul.f32 %v262, 0.6931472
          %v264 = vmul.f32 -0.5, %v258
          %v265 = vadd.f32 %v264, 1.0
          %v266 = vmul.f32 %v265, %v258
          %v267 = vand.u32 2147483647, %v258
          %vm268 = vcmp.lt.f32.partialorder %v267, 0.0004427343
          %v269 = vsel %vm268, %v266, %v263
          %v270 = vadd.f32 %v260, %v269
          %v271 = vadd.f32 %v270, %v247
          %v272 = vld [vmem:[%s225] sm:$0xff]
          %v273 = vsel %vm249, %v270, 0.0
          %v274 = vadd.f32 %v273, 0.0
          %v275 = vadd.f32 %v272, %v274
          %276 = vst [vmem:[%s225] sm:$0xff] %v275
          %s277 = scalar_lea.vmem %s225, 8 [#allocation7]
          %v278 = vld [vmem:[%s277] sm:$0xff]
          %v279 = vsel %vm249, %v271, 0.0
          %v280 = vadd.f32 %v279, 0.0
          %v281 = vadd.f32 %v278, %v280
          %282 = vst [vmem:[%s277] sm:$0xff] %v281
          %s283 = scalar_lea.vmem %s225, 16 [#allocation7]
          %v284 = vld [vmem:[%s283] sm:$0xff]
          %v285 = vsel %vm250, %v271, 0.0
          %v286 = vadd.f32 %v285, 0.0
          %v287 = vadd.f32 %v284, %v286
          %288 = vst [vmem:[%s283] sm:$0xff] %v287
          %s289 = scalar_lea.vmem %s225, 24 [#allocation7]
          %v290 = vld [vmem:[%s289] sm:$0xff]
          %v291 = vadd.f32 %v252, 0.0
          %v292 = vadd.f32 %v290, %v291
          %293 = vst [vmem:[%s289] sm:$0xff] %v292
          %s294 = scalar_lea.vmem %s225, 32 [#allocation7]
          %v295 = vld [vmem:[%s294] sm:$0xff]
          %v296 = vadd.f32 %v254, 0.0
          %v297 = vadd.f32 %v295, %v296
          %298 = vst [vmem:[%s294] sm:$0xff] %v297
        $region44: #{tpu_custom_call.1} parent=27 // pred_fallthru
          _
        %s299 = sand.u32 %s106, 1
        %s300 = scalar_lea.sflag [#allocation4], %s299
        %s301 = sand.u32 %s106, 1
        %s302 = smul.addr %s301, 40
        %s303 = scalar_lea.vmem [#allocation7], %s302
        // Predicated region
        $region45: #{tpu_custom_call.1} parent=27 // pred_check
          %p304 = pneg %p116
        $region46: #{tpu_custom_call.1} parent=27 // pred_check_branch
          %306 = sbr.rel (%p304) target = $region48
        $region47: #{tpu_custom_call.1} parent=27 // pred_region
          %s308 = ssub.s32 640, 640
          %309 = vsyncadd %s300, %s308
          %s310 = smul.addr %s26, 5
          %s311 = smul.addr %s310, 128
          %s312 = scalar_lea.hbm %s2, %s311
          %s313 = sshll.u32 %s303, 4
          %s314 = int_to_ptr.vmem [resolvable:$true] %s313
          %319 = dma.vmem_to_hbm [thread:$0]  %s314, 640, %s312, %s300, 128, 128, 8
        $region48: #{tpu_custom_call.1} parent=27 // pred_fallthru
          _
      $region28: #{tpu_custom_call.1} parent=5 // pred_fallthru
        _
      %p320 = scmp.le.s32.totalorder 2, %s17
      // Predicated region
      $region49: #{tpu_custom_call.1} parent=5 // pred_check
        %p321 = pneg %p320
      $region50: #{tpu_custom_call.1} parent=5 // pred_check_branch
        %323 = sbr.rel (%p321) target = $region52
      $region51: #{tpu_custom_call.1} parent=5 // pred_region
        %s324 = ssub.s32 %s17, 2
        // Predicated region
        $region53: #{tpu_custom_call.1} parent=51 // pred_check
          %p325 = pneg %p122
        $region54: #{tpu_custom_call.1} parent=51 // pred_check_branch
          %327 = sbr.rel (%p325) target = $region56
        $region55: #{tpu_custom_call.1} parent=51 // pred_region
          %s328 = sand.u32 %s107, 1
          %s329 = scalar_lea.sflag [#allocation4], %s328
          %s330 = sand.u32 %s107, 1
          %s331 = smul.addr %s330, 40
          %s332 = scalar_lea.vmem [#allocation7], %s331
          %333 = dma.done %s329, 640
        $region56: #{tpu_custom_call.1} parent=51 // pred_fallthru
          _
      $region52: #{tpu_custom_call.1} parent=5 // pred_fallthru
        _
    $region6: #{tpu_custom_call.1} parent=1 // loop_footer
      %s21 = sadd.s32 1, %s17
    $region7: #{tpu_custom_call.1} parent=1 // loop_footer_branch
      %16 = sbr.rel target = $region3
    $region8: #{tpu_custom_call.1} parent=1 // loop_exit
      _
    %334 = vsyncpa [#allocation3], 1
    %s335 = scalar_lea.sflag [#allocation3], 1
    %336 = vsyncpa %s335, 1
    %337 = vsyncpa [#allocation6], 1
    %s338 = scalar_lea.sflag [#allocation6], 1
    %339 = vsyncpa %s338, 1
    %340 = vsyncpa [#allocation4], 1
    %s341 = scalar_lea.sflag [#allocation4], 1
    %342 = vsyncpa %s341, 1

</llo_original>
